<compile_context>
chip_gen: v7x
topology: tpu7x:2x2x1
jax: 0.10.0
libtpu: 0.0.40
codegen_flags: <defaults>
</compile_context>

<pallas_src>
import jax
import jax.numpy as jnp
from jax.experimental import pallas as pl
from jax.experimental.pallas import tpu as pltpu

LANE = 128
# ~6 MiB tiles: grid-step overhead < 2% of the per-step HBM transfer time on
# all of v5e/v6e/v7x while 2x-double-buffered in + out (4 x tile) is ~24 MiB.
_TARGET_TILE_BYTES = 6 * 1024 * 1024
# 4 * tile + ~8 MiB of headroom for Mosaic scratch, capped well under v7x's
# 64 MiB per-TC VMEM (and above v5e's 16 MiB scoped default).
_VMEM_LIMIT_BYTES = min(48 * 1024 * 1024, 4 * _TARGET_TILE_BYTES + 8 * 1024 * 1024)
# Below this many elements the launch/DMA overhead dominates and blocking XLA
# fusion is a net loss -> emit the fused jnp expression instead.
_MIN_PALLAS_ELEMS = 1 << 19  # 512K elements (~2 MiB of f32)


def _ceil_div(a: int, b: int) -> int:
    return -(-a // b)


def _h_sigmoid_kernel(x_ref, o_ref):
    x = x_ref[...]
    dt = x.dtype
    # relu6(x + 3) / 6, computed in the input dtype (no silent f32 promotion).
    y = jnp.clip(x + jnp.asarray(3, dt), jnp.asarray(0, dt), jnp.asarray(6, dt))
    o_ref[...] = (y / 6.0).astype(o_ref.dtype)


def _h_sigmoid_jnp(x):
    dt = x.dtype
    y = jnp.clip(x + jnp.asarray(3, dt), jnp.asarray(0, dt), jnp.asarray(6, dt))
    return y / 6.0


def _num_tensorcores() -> int:
    """Best-effort TensorCore-per-chip count (v7x=2, v5e/v6e=1)."""
    try:
        info = pltpu.get_tpu_info()
    except Exception:
        return 1
    for attr in ("num_cores", "tensorcores_per_chip", "cores_per_chip",
                 "num_tensorcores"):
        v = getattr(info, attr, None)
        if isinstance(v, int) and v > 0:
            return v
    return 1


def _block_rows_for(rows: int, itemsize: int, num_cores: int) -> int:
    """Pick a (sublane-aligned) row-block size for a (rows, 128) slab."""
    # Sublane packing multiple: 8 rows for 4-byte, 16 for 2-byte, 32 for 1-byte.
    sub = max(8, 32 // max(itemsize, 1))
    max_rows_per_tile = max(sub, (_TARGET_TILE_BYTES // (LANE * itemsize)) // sub * sub)

    n_steps = _ceil_div(rows, max_rows_per_tile)
    if num_cores > 1:
        # v7x megacore: at least one step per core, and an even (balanced)
        # step count so neither TC is stuck with an extra tail tile.
        n_steps = max(n_steps, num_cores)
        rem = n_steps % num_cores
        if rem:
            n_steps += num_cores - rem

    if n_steps <= 1:
        # Single-TC chip and the whole array fits one tile: one full-array
        # block (allowed even if rows is not a multiple of 8 — exception rule).
        return rows

    block_rows = _ceil_div(rows, n_steps)          # near-uniform steps
    block_rows = _ceil_div(block_rows, sub) * sub  # round up to sublane multiple
    return min(block_rows, rows)


def h_sigmoid(x: jax.Array, *, use_pallas: bool | None = None,
              donate: bool = False) -> jax.Array:
    """Hard sigmoid: relu6(x + 3) / 6, matching the PyTorch module."""
    if not jnp.issubdtype(x.dtype, jnp.floating):
        # Torch's `/ 6` promotes integer inputs to float; do the same.
        return _h_sigmoid_jnp(x.astype(jnp.float32))

    n = x.size
    divisible = (n > 0) and (n % LANE == 0)
    if use_pallas is None:
        use_pallas = divisible and n >= _MIN_PALLAS_ELEMS
    if not (use_pallas and divisible):
        # Tiny / ragged tensors (or h_sigmoid with graph neighbors): let XLA
        # fuse the mem-bound expression into its producer/consumer instead of
        # paying pad + launch costs and an extra HBM round trip.
        return _h_sigmoid_jnp(x)

    rows = n // LANE
    x2d = x.reshape(rows, LANE)  # free: contiguous reshape, no padding
    block_rows = _block_rows_for(rows, x.dtype.itemsize, _num_tensorcores())
    grid = (pl.cdiv(rows, block_rows),)

    out2d = pl.pallas_call(
        _h_sigmoid_kernel,
        out_shape=jax.ShapeDtypeStruct((rows, LANE), x.dtype),
        grid_spec=pltpu.PrefetchScalarGridSpec(
            num_scalar_prefetch=0,
            grid=grid,
            in_specs=[pl.BlockSpec((block_rows, LANE), lambda i: (i, 0))],
            out_specs=pl.BlockSpec((block_rows, LANE), lambda i: (i, 0)),
        ),
        compiler_params=pltpu.CompilerParams(
            dimension_semantics=("parallel",),
            vmem_limit_bytes=_VMEM_LIMIT_BYTES,
        ),
        input_output_aliases=({0: 0} if donate else {}),
    )(x2d)
    return out2d.reshape(x.shape)


if __name__ == "__main__":
    key = jax.random.PRNGKey(0)
    k1, k2, k3 = jax.random.split(key, 3)

    # 1) NCHW f32 activation, forced through the Pallas path at a small shape
    #    (2048 elems -> 16 rows of 128 lanes).
    x1 = jax.random.normal(k1, (2, 4, 16, 16), dtype=jnp.float32) * 4.0
    y1 = jax.block_until_ready(h_sigmoid(x1, use_pallas=True))
    assert y1.shape == x1.shape and y1.dtype == x1.dtype
    assert jnp.allclose(y1, _h_sigmoid_jnp(x1), atol=1e-6, rtol=1e-6)

    # 2) bf16 through the Pallas path with the input buffer aliased.
    x2 = (jax.random.normal(k2, (2, 4, 16, 16), dtype=jnp.float32) * 4.0
          ).astype(jnp.bfloat16)
    y2_ref = _h_sigmoid_jnp(x2)
    y2 = jax.block_until_ready(h_sigmoid(x2, use_pallas=True, donate=True))
    assert y2.shape == x2.shape and y2.dtype == x2.dtype
    assert jnp.allclose(y2.astype(jnp.float32), y2_ref.astype(jnp.float32),
                        atol=1e-2, rtol=1e-2)

    # 3) Ragged / tiny size -> fused jnp fast path (no pad/concat/slice).
    x3 = jax.random.normal(k3, (3, 5, 7, 11), dtype=jnp.float32) * 4.0
    y3 = jax.block_until_ready(h_sigmoid(x3))
    assert y3.shape == x3.shape and y3.dtype == x3.dtype
    assert jnp.allclose(y3, _h_sigmoid_jnp(x3), atol=1e-6, rtol=1e-6)

    print("KERNEL_OK")
</pallas_src>

<mosaic_0001>
module attributes {stable_mosaic.version = 11 : i64} {
  func.func @_h_sigmoid_kernel(%arg0: i32, %arg1: memref<16x128xf32, #tpu.memory_space<vmem>>, %arg2: memref<16x128xf32, #tpu.memory_space<vmem>>) attributes {dimension_semantics = [#tpu.dimension_semantics<parallel>], iteration_bounds = array<i64: 1>, scalar_prefetch = 0 : i64, scratch_operands = 0 : i64, tpu.core_type = #tpu.core_type<tc>, window_params = [{transform_indices = @transform_0, window_bounds = array<i64: 16, 128>}, {transform_indices = @transform_1, window_bounds = array<i64: 16, 128>}]} {
    %c0 = arith.constant 0 : index
    %c0_0 = arith.constant 0 : index
    %0 = vector.load %arg1[%c0, %c0_0] : memref<16x128xf32, #tpu.memory_space<vmem>>, vector<16x128xf32>
    %cst = arith.constant 3.000000e+00 : f32
    %1 = vector.broadcast %cst : f32 to vector<16x128xf32>
    %2 = arith.addf %0, %1 : vector<16x128xf32>
    %cst_1 = arith.constant 0.000000e+00 : f32
    %cst_2 = arith.constant 6.000000e+00 : f32
    %3 = vector.broadcast %cst_1 : f32 to vector<16x128xf32>
    %4 = arith.maximumf %3, %2 : vector<16x128xf32>
    %5 = vector.broadcast %cst_2 : f32 to vector<16x128xf32>
    %6 = arith.minimumf %5, %4 : vector<16x128xf32>
    %cst_3 = arith.constant 6.000000e+00 : f32
    %7 = vector.broadcast %cst_3 : f32 to vector<16x128xf32>
    %8 = arith.divf %6, %7 : vector<16x128xf32>
    %c0_4 = arith.constant 0 : index
    %c0_5 = arith.constant 0 : index
    %9 = vector.load %arg2[%c0_4, %c0_5] : memref<16x128xf32, #tpu.memory_space<vmem>>, vector<16x128xf32>
    tpu.vector_store %arg2[%c0_4, %c0_5], %8 {strides = array<i32>} : memref<16x128xf32, #tpu.memory_space<vmem>>, vector<16x128xf32>,
    return
  }
  func.func @transform_0(%arg0: i32) -> (i32, i32) {
    %c0_i32 = arith.constant 0 : i32
    %c0_i32_0 = arith.constant 0 : i32
    return %arg0, %c0_i32 : i32, i32
  }
  func.func @transform_1(%arg0: i32) -> (i32, i32) {
    %c0_i32 = arith.constant 0 : i32
    %c0_i32_0 = arith.constant 0 : i32
    return %arg0, %c0_i32 : i32, i32
  }
}

</mosaic_0001>

<llo_original>
// kernel: tpu_custom_call.1
$region0: #{tpu_custom_call.1}
  #allocation0 [shape = 'u32[]', space=smem, size = 0x4, offset = 0x4, fixed_abs, tag = 'smem constant byte address 0x4 - core index']
  #allocation1 [shape = 'u32[144,128]{1,0:T(1,128)}', space=vmem, size = 0x12000, scoped, tag = 'internal scratch']
  %s0 = inlined_call_operand.hbm [shape: f32[16,128], index: 0, kind: input, shape index: {}]
  %s1 = inlined_call_operand.hbm [shape: f32[16,128], index: 1, kind: output, shape index: {}]
  %s2 = sld [smem:[#allocation0]]
  $region18: #{tpu_custom_call.1} parent=0
    _
  %s4 = ssub.s32 1, %s2
  %s5 = scalar_select 0, %s4, %s2
  $region1: #{tpu_custom_call.1} parent=0
    #allocation2 [shape = 'u8[8192]{0}', space=vmem, size = 0x2000, scoped, tag = 'input window, operand 0, single buffered']
    #allocation3 [shape = 's32[1]{0}', space=sflag, size = 0x4, scoped, tag = 'scoped memory for tpu_custom_call.1']
    #allocation4 [shape = 's32[1]{0}', space=sflag, size = 0x4, scoped, tag = 'scoped memory for tpu_custom_call.1']
    #allocation5 [shape = 'u8[8192]{0}', space=vmem, size = 0x2000, scoped, tag = 'output window, operand 0, single buffered']
    %6 = vsyncpa [#allocation3], 0
    %7 = vsyncpa [#allocation4], 0
    // Predicated region
    $region2: #{tpu_custom_call.1} parent=1 // pred_check
      _
    $region3: #{tpu_custom_call.1} parent=1 // pred_check_branch
      %9 = sbr.rel (0) target = $region5
    $region4: #{tpu_custom_call.1} parent=1 // pred_region
      %s11 = ssub.s32 256, 256
      %12 = vsyncadd [#allocation3], %s11
      %s13 = sshll.u32 [#allocation2], 4
      %s14 = int_to_ptr.vmem [resolvable:$true] %s13
      %19 = dma.hbm_to_vmem [thread:$0]  %s0, 256, %s14, [#allocation3], 128, 128, 8
    $region5: #{tpu_custom_call.1} parent=1 // pred_fallthru
      _
    // Predicated region
    $region6: #{tpu_custom_call.1} parent=1 // pred_check
      _
    $region7: #{tpu_custom_call.1} parent=1 // pred_check_branch
      %21 = sbr.rel (0) target = $region9
    $region8: #{tpu_custom_call.1} parent=1 // pred_region
      %22 = dma.done [#allocation3], 256
    $region9: #{tpu_custom_call.1} parent=1 // pred_fallthru
      _
    %v23 = vld [vmem:[#allocation2] sm:$0xff]
    %v24 = vld [vmem:[#allocation2 + $0x8] sm:$0xff]
    %v25 = vadd.f32 %v23, 3.0
    %v26 = vadd.f32 %v24, 3.0
    %v27 = vmax.f32 %v25, 0.0
    %v28 = vmax.f32 %v26, 0.0
    %v29 = vmin.f32 %v27, 6.0
    %v30 = vmin.f32 %v28, 6.0
    %v31 = vrcp.pop 6.0
    %v32 = vmul.f32 %v29, %v31
    %v33 = vmul.f32 %v30, %v31
    %34 = vst [vmem:[#allocation5] sm:$0xff] %v32
    %35 = vst [vmem:[#allocation5 + $0x8] sm:$0xff] %v33
    // Predicated region
    $region10: #{tpu_custom_call.1} parent=1 // pred_check
      _
    $region11: #{tpu_custom_call.1} parent=1 // pred_check_branch
      %37 = sbr.rel (0) target = $region13
    $region12: #{tpu_custom_call.1} parent=1 // pred_region
      %s39 = ssub.s32 256, 256
      %40 = vsyncadd [#allocation4], %s39
      %s41 = sshll.u32 [#allocation5], 4
      %s42 = int_to_ptr.vmem [resolvable:$true] %s41
      %47 = dma.vmem_to_hbm [thread:$0]  %s42, 256, %s1, [#allocation4], 128, 128, 8
    $region13: #{tpu_custom_call.1} parent=1 // pred_fallthru
      _
    // Predicated region
    $region14: #{tpu_custom_call.1} parent=1 // pred_check
      _
    $region15: #{tpu_custom_call.1} parent=1 // pred_check_branch
      %49 = sbr.rel (0) target = $region17
    $region16: #{tpu_custom_call.1} parent=1 // pred_region
      %50 = dma.done [#allocation4], 256
    $region17: #{tpu_custom_call.1} parent=1 // pred_fallthru
      _
    %51 = vsyncpa [#allocation3], 1
    %52 = vsyncpa [#allocation4], 1

</llo_original>
